<compile_context>
chip_gen: v5e
topology: v5e:2x2
jax: 0.10.0
libtpu: 0.0.40
codegen_flags: <defaults>
</compile_context>

<pallas_src>
import functools

import jax
import jax.numpy as jnp
from jax.experimental import pallas as pl
from jax.experimental.pallas import tpu as pltpu


_BLOCK_BUDGET = 2 * 1024 * 1024        # bytes per streamed block (per stream)
_FUSED_SLAB_LIMIT = 4 * 1024 * 1024    # max per-sample slab for the fused path
_VMEM_LIMIT = 48 * 1024 * 1024         # explicit scoped-VMEM headroom (< 64 MiB v7x)


def _largest_divisor_leq(n, cap):
    cap = max(1, min(n, int(cap)))
    for d in range(cap, 0, -1):
        if n % d == 0:
            return d
    return 1


def _pick_spatial_tile(hw_pad, c, budget):
    """Largest multiple-of-128 tile dividing hw_pad with c*tile*4B <= budget."""
    max_lanes = max(128, (budget // max(1, c * 4)) // 128 * 128)
    t = min(hw_pad, max_lanes)
    t = max(128, (t // 128) * 128)
    while t > 128 and hw_pad % t != 0:
        t -= 128
    return t


# ------------------------------- fused kernel --------------------------------
def _fused_kernel(inv_hw, x_ref, w1_ref, b1_ref, w2_ref, b2_ref, o_ref):
    # x_ref/o_ref: (bb, C, HW); weights resident in VMEM (constant index_map).
    x = x_ref[...]
    s = jnp.sum(x, axis=-1) * inv_hw                                   # (bb, C)
    h = jnp.dot(s, w1_ref[...], preferred_element_type=jnp.float32) + b1_ref[...]
    h = jnp.maximum(h, 0.0)                                            # relu
    z = jnp.dot(h, w2_ref[...], preferred_element_type=jnp.float32) + b2_ref[...]
    e = jax.nn.sigmoid(z)                                              # (bb, C)
    o_ref[...] = x * e[:, :, None]


def _fused_path(x3, w1_t, b1_2d, w2_t, b2_2d):
    B, C, HW = x3.shape
    hidden = w1_t.shape[1]
    bb = _largest_divisor_leq(B, max(1, _BLOCK_BUDGET // max(1, C * HW * 4)))
    grid = (B // bb,)
    return pl.pallas_call(
        functools.partial(_fused_kernel, 1.0 / float(HW)),
        out_shape=jax.ShapeDtypeStruct((B, C, HW), jnp.float32),
        grid_spec=pltpu.PrefetchScalarGridSpec(
            num_scalar_prefetch=0,
            grid=grid,
            in_specs=[
                pl.BlockSpec((bb, C, HW), lambda b: (b, 0, 0)),
                pl.BlockSpec((C, hidden), lambda b: (0, 0)),
                pl.BlockSpec((1, hidden), lambda b: (0, 0)),
                pl.BlockSpec((hidden, C), lambda b: (0, 0)),
                pl.BlockSpec((1, C), lambda b: (0, 0)),
            ],
            out_specs=pl.BlockSpec((bb, C, HW), lambda b: (b, 0, 0)),
        ),
        compiler_params=pltpu.CompilerParams(
            dimension_semantics=("parallel",),
            vmem_limit_bytes=_VMEM_LIMIT),
        cost_estimate=pl.CostEstimate(
            flops=2 * B * C * HW + 4 * B * C * hidden,
            transcendentals=B * C,
            bytes_accessed=2 * B * C * HW * 4 + 2 * C * hidden * 4),
    )(x3, w1_t, b1_2d, w2_t, b2_2d)


# ----------------------------- multipass kernels ------------------------------
def _squeeze_kernel(inv_hw, x_ref, o_ref, acc_ref):
    # x_ref: (bb, ct, thw); o_ref/acc_ref: (bb, ct, 1). Spatial axis is last in
    # the grid; accumulate in VMEM scratch, write output on the final step only.
    t = pl.program_id(2)

    @pl.when(t == 0)
    def _():
        acc_ref[...] = jnp.zeros_like(acc_ref)

    acc_ref[...] += jnp.sum(x_ref[...], axis=-1, keepdims=True)

    @pl.when(t == pl.num_programs(2) - 1)
    def _():
        o_ref[...] = acc_ref[...] * inv_hw


def _excite_kernel(s_ref, w1_ref, b1_ref, w2_ref, b2_ref, e_ref):
    # s_ref: (B, C); tiny FC stack, single block, off the streaming path.
    s = s_ref[...]
    h = jnp.dot(s, w1_ref[...], preferred_element_type=jnp.float32) + b1_ref[...]
    h = jnp.maximum(h, 0.0)
    z = jnp.dot(h, w2_ref[...], preferred_element_type=jnp.float32) + b2_ref[...]
    e_ref[...] = jax.nn.sigmoid(z)


def _scale_kernel(x_ref, e_ref, o_ref):
    # x_ref/o_ref: (bb, ct, thw); e_ref: (bb, ct, 1) -> pure lane broadcast.
    o_ref[...] = x_ref[...] * e_ref[...]


def _multipass_path(x3, w1_t, b1_2d, w2_t, b2_2d):
    B, C, HW = x3.shape
    hidden = w1_t.shape[1]

    # Pad the spatial axis to a multiple of 128 -> lane-dense blocks everywhere.
    hw_pad = pl.cdiv(HW, 128) * 128
    xp = x3 if hw_pad == HW else jnp.pad(x3, ((0, 0), (0, 0), (0, hw_pad - HW)))

    thw = _pick_spatial_tile(hw_pad, C, _BLOCK_BUDGET)
    bb = _largest_divisor_leq(B, max(1, _BLOCK_BUDGET // max(1, C * thw * 4)))
    # 2-way channel split when the batch axis offers only one block, so both
    # TensorCores (v7x megacore) have parallel work during the squeeze/scale.
    ct = C // 2 if (B // bb) == 1 and C % 16 == 0 else C
    n_b, n_c, n_t = B // bb, C // ct, hw_pad // thw

    common_params = pltpu.CompilerParams(
        dimension_semantics=("parallel", "parallel", "arbitrary"),
        vmem_limit_bytes=_VMEM_LIMIT)

    # --- stage 1: per-(sample, channel) spatial mean (streaming reduce). -----
    squeeze3 = pl.pallas_call(
        functools.partial(_squeeze_kernel, 1.0 / float(HW)),
        out_shape=jax.ShapeDtypeStruct((B, C, 1), jnp.float32),
        grid_spec=pltpu.PrefetchScalarGridSpec(
            num_scalar_prefetch=0,
            grid=(n_b, n_c, n_t),
            in_specs=[pl.BlockSpec((bb, ct, thw), lambda b, c, t: (b, c, t))],
            out_specs=pl.BlockSpec((bb, ct, 1), lambda b, c, t: (b, c, 0)),
            scratch_shapes=[pltpu.VMEM((bb, ct, 1), jnp.float32)]),
        compiler_params=common_params,
        cost_estimate=pl.CostEstimate(
            flops=B * C * hw_pad,
            transcendentals=0,
            bytes_accessed=B * C * hw_pad * 4 + B * C * 4),
    )(xp)

    # --- stage 2: tiny FC stack, one block (weights pre-transposed once). -----
    excite = pl.pallas_call(
        _excite_kernel,
        out_shape=jax.ShapeDtypeStruct((B, C), jnp.float32),
        in_specs=[pl.BlockSpec(memory_space=pltpu.MemorySpace.VMEM)] * 5,
        out_specs=pl.BlockSpec(memory_space=pltpu.MemorySpace.VMEM),
        cost_estimate=pl.CostEstimate(
            flops=4 * B * C * hidden,
            transcendentals=B * C,
            bytes_accessed=(2 * B * C + B * hidden
                            + 2 * C * hidden + hidden + C) * 4),
    )(squeeze3.reshape(B, C), w1_t, b1_2d, w2_t, b2_2d)
    e3 = excite.reshape(B, C, 1)

    # --- stage 3: broadcasted rescale, lane-dense streaming. ------------------
    outp = pl.pallas_call(
        _scale_kernel,
        out_shape=jax.ShapeDtypeStruct((B, C, hw_pad), jnp.float32),
        grid_spec=pltpu.PrefetchScalarGridSpec(
            num_scalar_prefetch=0,
            grid=(n_b, n_c, n_t),
            in_specs=[pl.BlockSpec((bb, ct, thw), lambda b, c, t: (b, c, t)),
                      pl.BlockSpec((bb, ct, 1), lambda b, c, t: (b, c, 0))],
            out_specs=pl.BlockSpec((bb, ct, thw), lambda b, c, t: (b, c, t)),
        ),
        compiler_params=pltpu.CompilerParams(
            dimension_semantics=("parallel", "parallel", "parallel"),
            vmem_limit_bytes=_VMEM_LIMIT),
        cost_estimate=pl.CostEstimate(
            flops=B * C * hw_pad,
            transcendentals=0,
            bytes_accessed=2 * B * C * hw_pad * 4 + B * C * 4),
    )(xp, e3)

    return outp[:, :, :HW] if hw_pad != HW else outp


# --------------------------------- wrapper ------------------------------------
@functools.partial(jax.jit, static_argnames=("force_multipass",))
def squeeze_excite_pallas(x_nchw, w1, b1, w2, b2, force_multipass=False):
    """x_nchw: (B, C, H, W) float32. PyTorch Linear layout:
    w1: (hidden, C), b1: (hidden,), w2: (C, hidden), b2: (C,)."""
    B, C, H, W = x_nchw.shape
    hidden = w1.shape[0]
    HW = H * W
    x3 = x_nchw.reshape(B, C, HW).astype(jnp.float32)

    # Tiny wrapper-side layout prep (constant-folded under jit).
    w1_t = jnp.transpose(w1).astype(jnp.float32)     # (C, hidden)
    w2_t = jnp.transpose(w2).astype(jnp.float32)     # (hidden, C)
    b1_2d = b1.reshape(1, hidden).astype(jnp.float32)
    b2_2d = b2.reshape(1, C).astype(jnp.float32)

    if (C * HW * 4 <= _FUSED_SLAB_LIMIT) and not force_multipass:
        out3 = _fused_path(x3, w1_t, b1_2d, w2_t, b2_2d)
    else:
        out3 = _multipass_path(x3, w1_t, b1_2d, w2_t, b2_2d)
    return out3.reshape(B, C, H, W)


def squeeze_excite_ref(x, w1, b1, w2, b2):
    """Pure-JAX reference matching the PyTorch forward."""
    squeeze = x.mean(axis=3).mean(axis=2)                       # (B, C)
    h = jax.nn.relu(squeeze @ w1.T + b1)                        # (B, hidden)
    e = jax.nn.sigmoid(h @ w2.T + b2)                           # (B, C)
    return x * e[:, :, None, None]


if __name__ == "__main__":
    # Small shapes consistent with the module (outDim == channels).
    B, C, H, W = 2, 16, 16, 16
    reduction = 4
    hidden = C // reduction

    key = jax.random.PRNGKey(0)
    kx, kw1, kb1, kw2, kb2 = jax.random.split(key, 5)

    x = jax.random.normal(kx, (B, C, H, W), dtype=jnp.float32)
    # PyTorch Linear layout: (out_features, in_features).
    w1 = jax.random.normal(kw1, (hidden, C), dtype=jnp.float32) * 0.1
    b1 = jax.random.normal(kb1, (hidden,), dtype=jnp.float32) * 0.1
    w2 = jax.random.normal(kw2, (C, hidden), dtype=jnp.float32) * 0.1
    b2 = jax.random.normal(kb2, (C,), dtype=jnp.float32) * 0.1

    ref = squeeze_excite_ref(x, w1, b1, w2, b2)

    # Fused single-pass path (default for slabs that fit VMEM).
    out = jax.block_until_ready(squeeze_excite_pallas(x, w1, b1, w2, b2))
    assert out.shape == (B, C, H, W)
    assert jnp.allclose(out, ref, atol=1e-5, rtol=1e-5), "fused path mismatch"

    # Streaming 3-pass fallback path (forced, to exercise it at small shapes).
    out_mp = jax.block_until_ready(
        squeeze_excite_pallas(x, w1, b1, w2, b2, force_multipass=True))
    assert jnp.allclose(out_mp, ref, atol=1e-5, rtol=1e-5), "multipass mismatch"

    # Non-multiple-of-128 spatial size (exercises lane padding in the fallback).
    x2 = jax.random.normal(kx, (B, C, 10, 10), dtype=jnp.float32)
    ref2 = squeeze_excite_ref(x2, w1, b1, w2, b2)
    out2 = jax.block_until_ready(
        squeeze_excite_pallas(x2, w1, b1, w2, b2, force_multipass=True))
    assert jnp.allclose(out2, ref2, atol=1e-5, rtol=1e-5), "padded path mismatch"

    print("KERNEL_OK")
</pallas_src>

<mosaic_0001>
module attributes {stable_mosaic.version = 11 : i64} {
  func.func @_fused_kernel(%arg0: i32, %arg1: memref<2x16x256xf32, #tpu.memory_space<vmem>>, %arg2: memref<16x4xf32, #tpu.memory_space<vmem>>, %arg3: memref<1x4xf32, #tpu.memory_space<vmem>>, %arg4: memref<4x16xf32, #tpu.memory_space<vmem>>, %arg5: memref<1x16xf32, #tpu.memory_space<vmem>>, %arg6: memref<2x16x256xf32, #tpu.memory_space<vmem>>) attributes {dimension_semantics = [#tpu.dimension_semantics<parallel>], iteration_bounds = array<i64: 1>, scalar_prefetch = 0 : i64, scratch_operands = 0 : i64, tpu.core_type = #tpu.core_type<tc>, window_params = [{transform_indices = @transform_0, window_bounds = array<i64: 2, 16, 256>}, {pipeline_mode = #tpu.pipeline_mode<synchronous>, transform_indices = @transform_1, window_bounds = array<i64: 16, 4>}, {pipeline_mode = #tpu.pipeline_mode<synchronous>, transform_indices = @transform_2, window_bounds = array<i64: 1, 4>}, {pipeline_mode = #tpu.pipeline_mode<synchronous>, transform_indices = @transform_3, window_bounds = array<i64: 4, 16>}, {pipeline_mode = #tpu.pipeline_mode<synchronous>, transform_indices = @transform_4, window_bounds = array<i64: 1, 16>}, {transform_indices = @transform_5, window_bounds = array<i64: 2, 16, 256>}]} {
    %c0 = arith.constant 0 : index
    %c0_0 = arith.constant 0 : index
    %c0_1 = arith.constant 0 : index
    %0 = vector.load %arg1[%c0, %c0_0, %c0_1] : memref<2x16x256xf32, #tpu.memory_space<vmem>>, vector<2x16x256xf32>
    %cst = arith.constant dense<0.000000e+00> : vector<2x16xf32>
    %1 = vector.multi_reduction <add>, %0, %cst [2] : vector<2x16x256xf32> to vector<2x16xf32>
    %cst_2 = arith.constant 3.906250e-03 : f32
    %2 = vector.broadcast %cst_2 : f32 to vector<2x16xf32>
    %3 = arith.mulf %1, %2 : vector<2x16xf32>
    %c0_3 = arith.constant 0 : index
    %c0_4 = arith.constant 0 : index
    %4 = vector.load %arg2[%c0_3, %c0_4] : memref<16x4xf32, #tpu.memory_space<vmem>>, vector<16x4xf32>
    %cst_5 = arith.constant dense<0.000000e+00> : vector<2x4xf32>
    %5 = tpu.matmul %3, %4, %cst_5 {dimension_numbers = #tpu.dot_dimension_numbers<[1], [0], [0], [1], [0, 0, 1, 1], [], []>} : vector<2x16xf32>, vector<16x4xf32>, vector<2x4xf32> -> vector<2x4xf32>
    %c0_6 = arith.constant 0 : index
    %c0_7 = arith.constant 0 : index
    %6 = vector.load %arg3[%c0_6, %c0_7] : memref<1x4xf32, #tpu.memory_space<vmem>>, vector<1x4xf32>
    %7 = vector.broadcast %6 : vector<1x4xf32> to vector<2x4xf32>
    %8 = arith.addf %5, %7 : vector<2x4xf32>
    %cst_8 = arith.constant 0.000000e+00 : f32
    %9 = vector.broadcast %cst_8 : f32 to vector<2x4xf32>
    %10 = arith.maximumf %8, %9 : vector<2x4xf32>
    %c0_9 = arith.constant 0 : index
    %c0_10 = arith.constant 0 : index
    %11 = vector.load %arg4[%c0_9, %c0_10] : memref<4x16xf32, #tpu.memory_space<vmem>>, vector<4x16xf32>
    %cst_11 = arith.constant dense<0.000000e+00> : vector<2x16xf32>
    %12 = tpu.matmul %10, %11, %cst_11 {dimension_numbers = #tpu.dot_dimension_numbers<[1], [0], [0], [1], [0, 0, 1, 1], [], []>} : vector<2x4xf32>, vector<4x16xf32>, vector<2x16xf32> -> vector<2x16xf32>
    %c0_12 = arith.constant 0 : index
    %c0_13 = arith.constant 0 : index
    %13 = vector.load %arg5[%c0_12, %c0_13] : memref<1x16xf32, #tpu.memory_space<vmem>>, vector<1x16xf32>
    %14 = vector.broadcast %13 : vector<1x16xf32> to vector<2x16xf32>
    %15 = arith.addf %12, %14 : vector<2x16xf32>
    %16 = arith.negf %15 : vector<2x16xf32>
    %17 = math.exp %16 : vector<2x16xf32>
    %cst_14 = arith.constant 1.000000e+00 : f32
    %18 = vector.broadcast %cst_14 : f32 to vector<2x16xf32>
    %19 = arith.addf %18, %17 : vector<2x16xf32>
    %20 = arith.divf %18, %19 : vector<2x16xf32>
    %21 = vector.shape_cast %20 : vector<2x16xf32> to vector<2x16x1xf32>
    %22 = vector.broadcast %21 : vector<2x16x1xf32> to vector<2x16x256xf32>
    %23 = arith.mulf %0, %22 : vector<2x16x256xf32>
    %c0_15 = arith.constant 0 : index
    %c0_16 = arith.constant 0 : index
    %c0_17 = arith.constant 0 : index
    %24 = vector.load %arg6[%c0_15, %c0_16, %c0_17] : memref<2x16x256xf32, #tpu.memory_space<vmem>>, vector<2x16x256xf32>
    tpu.vector_store %arg6[%c0_15, %c0_16, %c0_17], %23 {strides = array<i32>} : memref<2x16x256xf32, #tpu.memory_space<vmem>>, vector<2x16x256xf32>,
    return
  }
  func.func @transform_0(%arg0: i32) -> (i32, i32, i32) {
    %c0_i32 = arith.constant 0 : i32
    %c0_i32_0 = arith.constant 0 : i32
    %c0_i32_1 = arith.constant 0 : i32
    return %arg0, %c0_i32, %c0_i32_0 : i32, i32, i32
  }
  func.func @transform_1(%arg0: i32) -> (i32, i32) {
    %c0_i32 = arith.constant 0 : i32
    %c0_i32_0 = arith.constant 0 : i32
    %c0_i32_1 = arith.constant 0 : i32
    return %c0_i32, %c0_i32_0 : i32, i32
  }
  func.func @transform_2(%arg0: i32) -> (i32, i32) {
    %c0_i32 = arith.constant 0 : i32
    %c0_i32_0 = arith.constant 0 : i32
    %c0_i32_1 = arith.constant 0 : i32
    return %c0_i32, %c0_i32_0 : i32, i32
  }
  func.func @transform_3(%arg0: i32) -> (i32, i32) {
    %c0_i32 = arith.constant 0 : i32
    %c0_i32_0 = arith.constant 0 : i32
    %c0_i32_1 = arith.constant 0 : i32
    return %c0_i32, %c0_i32_0 : i32, i32
  }
  func.func @transform_4(%arg0: i32) -> (i32, i32) {
    %c0_i32 = arith.constant 0 : i32
    %c0_i32_0 = arith.constant 0 : i32
    %c0_i32_1 = arith.constant 0 : i32
    return %c0_i32, %c0_i32_0 : i32, i32
  }
  func.func @transform_5(%arg0: i32) -> (i32, i32, i32) {
    %c0_i32 = arith.constant 0 : i32
    %c0_i32_0 = arith.constant 0 : i32
    %c0_i32_1 = arith.constant 0 : i32
    return %arg0, %c0_i32, %c0_i32_0 : i32, i32, i32
  }
}

</mosaic_0001>

<llo_original>
// kernel: squeeze_excite_pallas.1
$region0: #{squeeze_excite_pallas.1}
  #allocation0 [shape = 'u32[]', space=smem, size = 0x4, offset = 0x4, fixed_abs, tag = 'smem constant byte address 0x4 - core index']
  #allocation1 [shape = 'u32[72,128]{1,0:T(1,128)}', space=vmem, size = 0x9000, scoped, tag = 'internal scratch']
  %s0 = inlined_call_operand.vmem [shape: f32[2,16,256], index: 0, kind: input, shape index: {}]
  %s1 = inlined_call_operand.vmem [shape: f32[16,4], index: 1, kind: input, shape index: {}]
  %s2 = inlined_call_operand.vmem [shape: f32[1,4], index: 2, kind: input, shape index: {}]
  %s3 = inlined_call_operand.vmem [shape: f32[4,16], index: 3, kind: input, shape index: {}]
  %s4 = inlined_call_operand.vmem [shape: f32[1,16], index: 4, kind: input, shape index: {}]
  %s5 = inlined_call_operand.vmem [shape: f32[2,16,256], index: 5, kind: output, shape index: {}]
  %s6 = sld [smem:[#allocation0]]
  $region30: #{squeeze_excite_pallas.1} parent=0
    _
  %s8 = ssub.s32 1, %s6
  %s9 = scalar_select 0, %s8, %s6
  // Predicated region
  $region2: #{squeeze_excite_pallas.1} parent=0 // pred_check
    _
  $region3: #{squeeze_excite_pallas.1} parent=0 // pred_check_branch
    %11 = sbr.rel (0) target = $region5
  $region4: #{squeeze_excite_pallas.1} parent=0 // pred_region
    _
  $region5: #{squeeze_excite_pallas.1} parent=0 // pred_fallthru
    _
  // Predicated region
  $region6: #{squeeze_excite_pallas.1} parent=0 // pred_check
    _
  $region7: #{squeeze_excite_pallas.1} parent=0 // pred_check_branch
    %13 = sbr.rel (0) target = $region9
  $region8: #{squeeze_excite_pallas.1} parent=0 // pred_region
    _
  $region9: #{squeeze_excite_pallas.1} parent=0 // pred_fallthru
    _
  // Predicated region
  $region10: #{squeeze_excite_pallas.1} parent=0 // pred_check
    _
  $region11: #{squeeze_excite_pallas.1} parent=0 // pred_check_branch
    %15 = sbr.rel (0) target = $region13
  $region12: #{squeeze_excite_pallas.1} parent=0 // pred_region
    _
  $region13: #{squeeze_excite_pallas.1} parent=0 // pred_fallthru
    _
  // Predicated region
  $region14: #{squeeze_excite_pallas.1} parent=0 // pred_check
    _
  $region15: #{squeeze_excite_pallas.1} parent=0 // pred_check_branch
    %17 = sbr.rel (0) target = $region17
  $region16: #{squeeze_excite_pallas.1} parent=0 // pred_region
    _
  $region17: #{squeeze_excite_pallas.1} parent=0 // pred_fallthru
    _
  // Predicated region
  $region18: #{squeeze_excite_pallas.1} parent=0 // pred_check
    _
  $region19: #{squeeze_excite_pallas.1} parent=0 // pred_check_branch
    %19 = sbr.rel (0) target = $region21
  $region20: #{squeeze_excite_pallas.1} parent=0 // pred_region
    _
  $region21: #{squeeze_excite_pallas.1} parent=0 // pred_fallthru
    _
  %v20 = vld [vmem:[%s0] sm:$0xff]
  %v21 = vld [vmem:[%s0 + $0x8] sm:$0xff]
  %v22 = vld [vmem:[%s0 + $0x10] sm:$0xff]
  %v23 = vld [vmem:[%s0 + $0x18] sm:$0xff]
  %v24 = vld [vmem:[%s0 + $0x20] sm:$0xff]
  %v25 = vld [vmem:[%s0 + $0x28] sm:$0xff]
  %v26 = vld [vmem:[%s0 + $0x30] sm:$0xff]
  %v27 = vld [vmem:[%s0 + $0x38] sm:$0xff]
  %v28 = vadd.f32 %v20, %v21
  %29 = vadd.xlane.f32.xlu0 %v28
  %v30 = vpop.xlane.xlu0 %29
  %v31 = vadd.f32 %v22, %v23
  %32 = vadd.xlane.f32.xlu0 %v31
  %v33 = vpop.xlane.xlu0 %32
  %v34 = vadd.f32 %v24, %v25
  %35 = vadd.xlane.f32.xlu0 %v34
  %v36 = vpop.xlane.xlu0 %35
  %v37 = vadd.f32 %v26, %v27
  %38 = vadd.xlane.f32.xlu0 %v37
  %v39 = vpop.xlane.xlu0 %38
  %v40 = vmul.f32 %v30, 0.00390625
  %v41 = vmul.f32 %v33, 0.00390625
  %v42 = vmul.f32 %v36, 0.00390625
  %v43 = vmul.f32 %v39, 0.00390625
  %v44 = vld [vmem:[%s1] sm:$0xff]
  %v45 = vld [vmem:[%s1 + $0x8] sm:$0xff]
  %v46 = vld [vmem:[%s2] sm:$0x1]
  %v48 = vperm.slane %v46, 0
  %v54 = vlaneseq
  %v55 = vand.u32 %v54, 127
  %v56 = vperm.slane %v40, %v55
  %v57 = vadd.s32 %v55, 4294967288
  %v58 = vperm.slane %v41, %v57
  %vm59 = vcmask 130112
  %v60 = vsel %vm59, %v58, %v56
  %v61 = vperm.slane %v42, %v55
  %v62 = vperm.slane %v43, %v57
  %v63 = vsel %vm59, %v62, %v61
  %vm64 = vcmask 1041409
  %v65 = vsel %vm64, %v63, %v60
  %vm66 = vcmask 130048
  %v67 = vsel %vm66, %v65, 0
  %69 = vmatpush.msra.mxu0 0.0
  %70 = vmatpush.msra.mxu0 0.0
  %71 = vmatpush.msra.mxu0 0.0
  %72 = vmatpush.msra.mxu0 0.0
  %73 = vmatpush.msra.mxu0 0.0
  %74 = vmatpush.msra.mxu0 0.0
  %75 = vmatpush.msra.mxu0 0.0
  %76 = vmatpush.msra.mxu0 0.0
  %77 = vmatpush.msra.mxu0 0.0
  %78 = vmatpush.msra.mxu0 0.0
  %79 = vmatpush.msra.mxu0 0.0
  %80 = vmatpush.msra.mxu0 0.0
  %81 = vmatpush.msra.mxu0 0.0
  %82 = vmatpush.msra.mxu0 0.0
  %83 = vmatpush.msra.mxu0 %v45
  %84 = vmatpush.msra.mxu0 %v44
  %85 = vmatmul.f32.gmra.mxu0 %v67
  %v86 = vpop.f32.mrf.mxu0
  %v87 = vadd.f32 %v48, %v86
  %88 = vdwg.mxu0
  %v89 = vmax.f32 %v87, 0.0
  %v90 = vld [vmem:[%s3] sm:$0xf]
  %v91 = vld [vmem:[%s4] sm:$0x1]
  %v93 = vperm.slane %v91, 0
  %vm95 = vcmask 31744
  %v97 = vsel %vm95, %v89, 0
  %vm99 = vcmask 1043456
  %v101 = vsel %vm99, %v90, 0
  %103 = vmatpush.msra.mxu0 0.0
  %104 = vmatpush.msra.mxu0 0.0
  %105 = vmatpush.msra.mxu0 0.0
  %106 = vmatpush.msra.mxu0 0.0
  %107 = vmatpush.msra.mxu0 0.0
  %108 = vmatpush.msra.mxu0 0.0
  %109 = vmatpush.msra.mxu0 0.0
  %110 = vmatpush.msra.mxu0 0.0
  %111 = vmatpush.msra.mxu0 0.0
  %112 = vmatpush.msra.mxu0 0.0
  %113 = vmatpush.msra.mxu0 0.0
  %114 = vmatpush.msra.mxu0 0.0
  %115 = vmatpush.msra.mxu0 0.0
  %116 = vmatpush.msra.mxu0 0.0
  %117 = vmatpush.msra.mxu0 0.0
  %118 = vmatpush.msra.mxu0 %v101
  %119 = vmatmul.f32.gmra.mxu0 %v97
  %v120 = vpop.f32.mrf.mxu0
  %v121 = vadd.f32 %v93, %v120
  %122 = vdwg.mxu0
  %v123 = vxor.u32 %v121, 2147483648
  %v124 = vmul.f32 %v123, 1.442695
  %v125 = vpow.pop %v124
  %v126 = vadd.f32 %v125, 1.0
  %v127 = vrcp.pop %v126
  %v128 = vmul.f32 %v126, %v127
  %v129 = vsub.f32 1.0, %v128
  %v130 = vmul.f32 %v127, %v129
  %v131 = vadd.f32 %v127, %v130
  %vm132 = vweird.f32 %v126
  %vm133 = vweird.f32 %v127
  %vm134 = vmor %vm132, %vm133
  %v135 = vsel %vm134, %v127, %v131
  %v136 = vand.u32 2147483647, %v126
  %vm137 = vcmp.eq.f32.partialorder %v136, 8.507059e+37
  %v138 = vand.u32 %v126, 2147483648
  %v139 = vor.u32 1.1754944e-38, %v138
  %v140 = vsel %vm137, %v139, %v135
  %v141 = vmul.f32 1.0, %v140
  %v142 = vperm.slane %v141, 0
  %v143 = vlaneseq
  %v144 = vshrl.u32 %v143, 7
  %146 = vset.pattern.permute.xlu0 %v144
  %147 = vperm.xlu0 %146, %v142
  %v148 = vpop.permute.xlu0 %147
  %v149 = vlaneseq
  %v150 = vshrl.u32 %v149, 7
  %v151 = vadd.s32 %v150, 8
  %152 = vset.pattern.permute.xlu0 %v151
  %153 = vperm.xlu0 %152, %v142
  %v154 = vpop.permute.xlu0 %153
  %v155 = vperm.slane %v141, 1
  %v156 = vlaneseq
  %v157 = vshrl.u32 %v156, 7
  %159 = vset.pattern.permute.xlu0 %v157
  %160 = vperm.xlu0 %159, %v155
  %v161 = vpop.permute.xlu0 %160
  %v162 = vlaneseq
  %v163 = vshrl.u32 %v162, 7
  %v164 = vadd.s32 %v163, 8
  %165 = vset.pattern.permute.xlu0 %v164
  %166 = vperm.xlu0 %165, %v155
  %v167 = vpop.permute.xlu0 %166
  %v168 = vmul.f32 %v20, %v148
  %v169 = vmul.f32 %v21, %v148
  %v170 = vmul.f32 %v22, %v154
  %v171 = vmul.f32 %v23, %v154
  %v172 = vmul.f32 %v24, %v161
  %v173 = vmul.f32 %v25, %v161
  %v174 = vmul.f32 %v26, %v167
  %v175 = vmul.f32 %v27, %v167
  %176 = vst [vmem:[%s5] sm:$0xff] %v168
  %177 = vst [vmem:[%s5 + $0x8] sm:$0xff] %v169
  %178 = vst [vmem:[%s5 + $0x10] sm:$0xff] %v170
  %179 = vst [vmem:[%s5 + $0x18] sm:$0xff] %v171
  %180 = vst [vmem:[%s5 + $0x20] sm:$0xff] %v172
  %181 = vst [vmem:[%s5 + $0x28] sm:$0xff] %v173
  %182 = vst [vmem:[%s5 + $0x30] sm:$0xff] %v174
  %183 = vst [vmem:[%s5 + $0x38] sm:$0xff] %v175
  // Predicated region
  $region22: #{squeeze_excite_pallas.1} parent=0 // pred_check
    _
  $region23: #{squeeze_excite_pallas.1} parent=0 // pred_check_branch
    %185 = sbr.rel (0) target = $region25
  $region24: #{squeeze_excite_pallas.1} parent=0 // pred_region
    _
  $region25: #{squeeze_excite_pallas.1} parent=0 // pred_fallthru
    _
  // Predicated region
  $region26: #{squeeze_excite_pallas.1} parent=0 // pred_check
    _
  $region27: #{squeeze_excite_pallas.1} parent=0 // pred_check_branch
    %187 = sbr.rel (0) target = $region29
  $region28: #{squeeze_excite_pallas.1} parent=0 // pred_region
    _
  $region29: #{squeeze_excite_pallas.1} parent=0 // pred_fallthru
    _

</llo_original>
